<compile_context>
chip_gen: v6e
topology: v6e:2x2x1
jax: 0.10.0
libtpu: 0.0.40
codegen_flags: <defaults>
</compile_context>

<pallas_src>
import jax
import jax.numpy as jnp
from jax.experimental import pallas as pl
from jax.experimental.pallas import tpu as pltpu


def _cfl_kernel(wt_ref, xdiff_ref, mask_ref, out_ref):
    # wt_ref:    (ns, C)      bf16  (W^T, same block every grid step)
    # xdiff_ref: (C, TILE_N)  bf16  ((pred1 - pred)^T tile, N on the lane axis)
    # mask_ref:  (1, TILE_N)  f32   per-sample mask (broadcast over ns rows)
    # out_ref:   (1,)         f32   SMEM, resident accumulator across the grid
    @pl.when(pl.program_id(0) == 0)
    def _init():
        out_ref[0] = jnp.float32(0.0)

    # Single MXU matmul: (ns, C) @ (C, TILE_N) -> (ns, TILE_N), f32 accumulate.
    diff = jnp.dot(wt_ref[...], xdiff_ref[...],
                   preferred_element_type=jnp.float32)
    diff = diff * mask_ref[...]            # mask per column (per gathered point)

    absd = jnp.abs(diff)
    # F.smooth_l1_loss(..., size_average=False): reduction='sum', beta=1.0
    sl1 = jnp.where(absd < 1.0, 0.5 * diff * diff, absd - 0.5)
    out_ref[0] += jnp.sum(sl1)


def contrastive_fourier_loss(output, mask, ind, output1, *, fourier_degree,
                             num_sample, max_tile_n=2048):
    B, C, H, W = output.shape
    nreal = 2 * fourier_degree + 1
    assert C == 2 * nreal, "channel dim must be 2*(2*fd+1)"

    # _tranpose_and_gather_feat without materializing a full NCHW->NHWC copy:
    # gather K points along the flattened spatial axis -> (B, C, K).
    def gather(feat):
        f = feat.reshape(B, C, H * W)
        return jnp.take_along_axis(f, ind[:, None, :], axis=2)

    pred = gather(output).astype(jnp.float32)      # (B, C, K)
    pred1 = gather(output1).astype(jnp.float32)    # (B, C, K)

    # Channel-major, lane-dense layout: (C, N) with N = B*K on the lane axis.
    xdiff = jnp.transpose(pred1 - pred, (1, 0, 2)).reshape(C, -1)
    N = xdiff.shape[1]
    mask_flat = mask.reshape(1, -1).astype(jnp.float32)          # (1, N)

    # Stacked Fourier->poly x-transform:  W = [[cos(T)], [-sin(T)]]  (C, ns).
    k_vect = jnp.arange(-fourier_degree, fourier_degree + 1,
                        dtype=jnp.float32)[:, None]              # (nreal, 1)
    i_vect = jnp.arange(0, num_sample, dtype=jnp.float32)[None, :]   # (1, ns)
    tmat = (2.0 * jnp.pi / num_sample) * (k_vect @ i_vect)       # (nreal, ns)
    wt = jnp.concatenate([jnp.cos(tmat), -jnp.sin(tmat)], axis=0).T  # (ns, C)

    # Pad N to a 128-lane-aligned tile multiple; padded columns are all-zero
    # (mask 0 and diff 0) so they contribute nothing to the summed loss.
    tile_n = min(max_tile_n, max(128, -(-N // 128) * 128))
    n_pad = -(-N // tile_n) * tile_n
    if n_pad != N:
        xdiff = jnp.pad(xdiff, ((0, 0), (0, n_pad - N)))
        mask_flat = jnp.pad(mask_flat, ((0, 0), (0, n_pad - N)))

    # bf16 MXU operands (f32 accumulation in-kernel); also halves HBM traffic
    # for the dominant xdiff input.
    xdiff = xdiff.astype(jnp.bfloat16)
    wt = wt.astype(jnp.bfloat16)

    grid = (n_pad // tile_n,)

    loss_sum = pl.pallas_call(
        _cfl_kernel,
        out_shape=jax.ShapeDtypeStruct((1,), jnp.float32),
        grid=grid,
        in_specs=[
            pl.BlockSpec((num_sample, C), lambda i: (0, 0)),   # W^T, resident
            pl.BlockSpec((C, tile_n), lambda i: (0, i)),       # diff tile
            pl.BlockSpec((1, tile_n), lambda i: (0, i)),       # mask tile
        ],
        out_specs=pl.BlockSpec(memory_space=pltpu.MemorySpace.SMEM),
        compiler_params=pltpu.CompilerParams(
            # scalar output is accumulated across the grid -> sequential axis
            dimension_semantics=("arbitrary",)),
    )(wt, xdiff, mask_flat)

    # Tiny epilogue in XLA: mask was expanded to (N, ns) before .sum() in the
    # PyTorch reference, so mask_sum = sum(mask) * ns.
    mask_sum = jnp.sum(mask.astype(jnp.float32)) * jnp.float32(num_sample)
    return loss_sum[0] / (mask_sum + jnp.float32(1e-4))


if __name__ == "__main__":
    # small shapes consistent with the forward pass
    fd = 4          # fourier degree  -> C = 2*(2*fd+1) = 18
    ns = 16         # num_sample
    B, K = 2, 8
    H = W = 16
    C = 2 * (2 * fd + 1)

    key = jax.random.PRNGKey(0)
    k1, k2, k3, k4 = jax.random.split(key, 4)

    output = jax.random.normal(k1, (B, C, H, W), dtype=jnp.float32)
    output1 = jax.random.normal(k2, (B, C, H, W), dtype=jnp.float32)
    ind = jax.random.randint(k3, (B, K), 0, H * W, dtype=jnp.int32)
    mask = (jax.random.uniform(k4, (B, K)) > 0.3).astype(jnp.float32)

    loss = contrastive_fourier_loss(output, mask, ind, output1,
                                    fourier_degree=fd, num_sample=ns)
    jax.block_until_ready(loss)
    print("KERNEL_OK")
</pallas_src>

<mosaic_0001>
module attributes {stable_mosaic.version = 11 : i64} {
  func.func @_cfl_kernel(%arg0: i32, %arg1: memref<16x18xbf16, #tpu.memory_space<vmem>>, %arg2: memref<18x128xbf16, #tpu.memory_space<vmem>>, %arg3: memref<1x128xf32, #tpu.memory_space<vmem>>, %arg4: memref<1xf32, #tpu.memory_space<smem>>) attributes {dimension_semantics = [#tpu.dimension_semantics<arbitrary>], iteration_bounds = array<i64: 1>, scalar_prefetch = 0 : i64, scratch_operands = 0 : i64, tpu.core_type = #tpu.core_type<tc>, window_params = [{pipeline_mode = #tpu.pipeline_mode<synchronous>, transform_indices = @transform_0, window_bounds = array<i64: 16, 18>}, {transform_indices = @transform_1, window_bounds = array<i64: 18, 128>}, {transform_indices = @transform_2, window_bounds = array<i64: 1, 128>}, {transform_indices = @transform_3, window_bounds = array<i64: 1>}]} {
    %c0_i32 = arith.constant 0 : i32
    %0 = arith.cmpi eq, %arg0, %c0_i32 : i32
    %1 = arith.extui %0 : i1 to i32
    %c0_i32_0 = arith.constant 0 : i32
    %2 = arith.cmpi ne, %1, %c0_i32_0 : i32
    scf.if %2 {
      %cst_12 = arith.constant 0.000000e+00 : f32
      %c0_13 = arith.constant 0 : index
      %25 = memref.load %arg4[%c0_13] : memref<1xf32, #tpu.memory_space<smem>>
      memref.store %cst_12, %arg4[%c0_13] : memref<1xf32, #tpu.memory_space<smem>>
    } else {
    }
    %c0 = arith.constant 0 : index
    %c0_1 = arith.constant 0 : index
    %3 = vector.load %arg1[%c0, %c0_1] : memref<16x18xbf16, #tpu.memory_space<vmem>>, vector<16x18xbf16>
    %c0_2 = arith.constant 0 : index
    %c0_3 = arith.constant 0 : index
    %4 = vector.load %arg2[%c0_2, %c0_3] : memref<18x128xbf16, #tpu.memory_space<vmem>>, vector<18x128xbf16>
    %cst = arith.constant dense<0.000000e+00> : vector<16x128xf32>
    %5 = tpu.matmul %3, %4, %cst {dimension_numbers = #tpu.dot_dimension_numbers<[1], [0], [0], [1], [0, 0, 1, 1], [], []>} : vector<16x18xbf16>, vector<18x128xbf16>, vector<16x128xf32> -> vector<16x128xf32>
    %c0_4 = arith.constant 0 : index
    %c0_5 = arith.constant 0 : index
    %6 = vector.load %arg3[%c0_4, %c0_5] : memref<1x128xf32, #tpu.memory_space<vmem>>, vector<1x128xf32>
    %7 = vector.broadcast %6 : vector<1x128xf32> to vector<16x128xf32>
    %8 = arith.mulf %5, %7 : vector<16x128xf32>
    %9 = math.absf %8 : vector<16x128xf32>
    %cst_6 = arith.constant 1.000000e+00 : f32
    %10 = vector.broadcast %cst_6 : f32 to vector<16x128xf32>
    %11 = arith.cmpf olt, %9, %10 : vector<16x128xf32>
    %cst_7 = arith.constant 5.000000e-01 : f32
    %12 = vector.broadcast %cst_7 : f32 to vector<16x128xf32>
    %13 = arith.mulf %12, %8 : vector<16x128xf32>
    %14 = arith.mulf %13, %8 : vector<16x128xf32>
    %cst_8 = arith.constant 5.000000e-01 : f32
    %15 = vector.broadcast %cst_8 : f32 to vector<16x128xf32>
    %16 = arith.subf %9, %15 : vector<16x128xf32>
    %17 = arith.select %11, %14, %16 : vector<16x128xi1>, vector<16x128xf32>
    %c0_9 = arith.constant 0 : index
    %18 = memref.load %arg4[%c0_9] : memref<1xf32, #tpu.memory_space<smem>>
    %19 = vector.shape_cast %17 : vector<16x128xf32> to vector<1x16x128xf32>
    %cst_10 = arith.constant dense<0.000000e+00> : vector<1xf32>
    %20 = vector.multi_reduction <add>, %19, %cst_10 [1, 2] : vector<1x16x128xf32> to vector<1xf32>
    %21 = vector.shape_cast %20 : vector<1xf32> to vector<1x1x1xf32>
    %22 = vector.extract %21[0, 0, 0] : f32 from vector<1x1x1xf32>
    %23 = arith.addf %18, %22 : f32
    %c0_11 = arith.constant 0 : index
    %24 = memref.load %arg4[%c0_11] : memref<1xf32, #tpu.memory_space<smem>>
    memref.store %23, %arg4[%c0_11] : memref<1xf32, #tpu.memory_space<smem>>
    return
  }
  func.func @transform_0(%arg0: i32) -> (i32, i32) {
    %c0_i32 = arith.constant 0 : i32
    %c0_i32_0 = arith.constant 0 : i32
    %c0_i32_1 = arith.constant 0 : i32
    return %c0_i32, %c0_i32_0 : i32, i32
  }
  func.func @transform_1(%arg0: i32) -> (i32, i32) {
    %c0_i32 = arith.constant 0 : i32
    %c0_i32_0 = arith.constant 0 : i32
    return %c0_i32, %arg0 : i32, i32
  }
  func.func @transform_2(%arg0: i32) -> (i32, i32) {
    %c0_i32 = arith.constant 0 : i32
    %c0_i32_0 = arith.constant 0 : i32
    return %c0_i32, %arg0 : i32, i32
  }
  func.func @transform_3(%arg0: i32) -> i32 {
    %c0_i32 = arith.constant 0 : i32
    %c0_i32_0 = arith.constant 0 : i32
    return %c0_i32 : i32
  }
}

</mosaic_0001>

<llo_original>
// kernel: tpu_custom_call.1
$region0: #{tpu_custom_call.1}
  #allocation0 [shape = 'u32[]', space=smem, size = 0x4, offset = 0x4, fixed_abs, tag = 'smem constant byte address 0x4 - core index']
  #allocation1 [shape = 'u32[144,128]{1,0:T(1,128)}', space=vmem, size = 0x12000, scoped, tag = 'internal scratch']
  %s0 = inlined_call_operand.hbm [shape: bf16[16,18], index: 0, kind: input, shape index: {}]
  %s1 = inlined_call_operand.hbm [shape: bf16[18,128], index: 1, kind: input, shape index: {}]
  %s2 = inlined_call_operand.vmem [shape: f32[1,128], index: 2, kind: input, shape index: {}]
  %s3 = inlined_call_operand.hbm [shape: f32[1], index: 3, kind: output, shape index: {}]
  %s4 = sld [smem:[#allocation0]]
  $region34: #{tpu_custom_call.1} parent=0
    _
  %s6 = ssub.s32 1, %s4
  %s7 = scalar_select 0, %s6, %s4
  $region1: #{tpu_custom_call.1} parent=0
    #allocation2 [shape = 'u8[4096]{0}', space=vmem, size = 0x1000, scoped, tag = 'input window, operand 0, single buffered']
    #allocation3 [shape = 's32[1]{0}', space=sflag, size = 0x4, scoped, tag = 'scoped memory for tpu_custom_call.1']
    #allocation4 [shape = 's32[1]{0}', space=sflag, size = 0x4, scoped, tag = 'scoped memory for tpu_custom_call.1']
    #allocation5 [shape = 'u8[6144]{0}', space=vmem, size = 0x1800, scoped, tag = 'input window, operand 1, single buffered']
    #allocation6 [shape = 's32[1]{0}', space=sflag, size = 0x4, scoped, tag = 'scoped memory for tpu_custom_call.1']
    #allocation7 [shape = 'u8[512]{0}', space=smem, size = 0x200, scoped, tag = 'output window, operand 0, single buffered']
    %8 = vsyncpa [#allocation3], 0
    %9 = vsyncpa [#allocation6], 0
    %10 = vsyncpa [#allocation4], 0
    // Predicated region
    $region2: #{tpu_custom_call.1} parent=1 // pred_check
      _
    $region3: #{tpu_custom_call.1} parent=1 // pred_check_branch
      %12 = sbr.rel (0) target = $region5
    $region4: #{tpu_custom_call.1} parent=1 // pred_region
      %s14 = ssub.s32 128, 128
      %15 = vsyncadd [#allocation3], %s14
      %s16 = sshll.u32 [#allocation2], 4
      %s17 = int_to_ptr.vmem [resolvable:$true] %s16
      %22 = dma.hbm_to_vmem [thread:$0]  %s0, 128, %s17, [#allocation3], 64, 64, 4
    $region5: #{tpu_custom_call.1} parent=1 // pred_fallthru
      _
    // Predicated region
    $region6: #{tpu_custom_call.1} parent=1 // pred_check
      _
    $region7: #{tpu_custom_call.1} parent=1 // pred_check_branch
      %24 = sbr.rel (0) target = $region9
    $region8: #{tpu_custom_call.1} parent=1 // pred_region
      %s26 = ssub.s32 192, 192
      %27 = vsyncadd [#allocation6], %s26
      %s28 = sshll.u32 [#allocation5], 4
      %s29 = int_to_ptr.vmem [resolvable:$true] %s28
      %34 = dma.hbm_to_vmem [thread:$0]  %s1, 192, %s29, [#allocation6], 64, 64, 4
    $region9: #{tpu_custom_call.1} parent=1 // pred_fallthru
      _
    // Predicated region
    $region10: #{tpu_custom_call.1} parent=1 // pred_check
      _
    $region11: #{tpu_custom_call.1} parent=1 // pred_check_branch
      %36 = sbr.rel (0) target = $region13
    $region12: #{tpu_custom_call.1} parent=1 // pred_region
      _
    $region13: #{tpu_custom_call.1} parent=1 // pred_fallthru
      _
    // Predicated region
    $region14: #{tpu_custom_call.1} parent=1 // pred_check
      _
    $region15: #{tpu_custom_call.1} parent=1 // pred_check_branch
      %38 = sbr.rel (0) target = $region17
    $region16: #{tpu_custom_call.1} parent=1 // pred_region
      %39 = dma.done [#allocation3], 128
    $region17: #{tpu_custom_call.1} parent=1 // pred_fallthru
      _
    // Predicated region
    $region18: #{tpu_custom_call.1} parent=1 // pred_check
      _
    $region19: #{tpu_custom_call.1} parent=1 // pred_check_branch
      %41 = sbr.rel (0) target = $region21
    $region20: #{tpu_custom_call.1} parent=1 // pred_region
      %42 = dma.done [#allocation6], 192
    $region21: #{tpu_custom_call.1} parent=1 // pred_fallthru
      _
    %p44 = scmp.eq.s32.totalorder 0, 0
    // Predicated region
    $region22: #{tpu_custom_call.1} parent=1 // pred_check
      %p45 = pneg %p44
    $region23: #{tpu_custom_call.1} parent=1 // pred_check_branch
      %47 = sbr.rel (%p45) target = $region25
    $region24: #{tpu_custom_call.1} parent=1 // pred_region
      %s48 = scalar_lea.smem [#allocation7], 0
      %49 = sst [smem:[%s48]] 0.0
    $region25: #{tpu_custom_call.1} parent=1 // pred_fallthru
      _
    %v50 = vld [vmem:[#allocation2] sm:$0xf]
    %v51 = vld [vmem:[#allocation2 + $0x4] sm:$0xf]
    %v52 = vld [vmem:[#allocation5] sm:$0xf]
    %v53 = vld [vmem:[#allocation5 + $0x4] sm:$0xf]
    %v54 = vld [vmem:[#allocation5 + $0x8] sm:$0x1]
    %v57 = vunpack.c.l.b16 %v50
    %v58 = vunpack.c.l.b16 %v51
    %v59 = vpack.c.b16 %v58, %v57
    %v63 = vunpack.c.l.b16 %v52
    %v64 = vunpack.c.l.b16 %v53
    %v65 = vunpack.c.l.b16 %v54
    %v66 = vpack.c.b16 %v64, %v63
    %v67 = vpack.c.b16 %v65, %v65
    %vm69 = vcmask 146432
    %v71 = vsel %vm69, %v59, 0
    %vm73 = vcmask 1040384
    %v75 = vsel %vm73, %v67, 0
    %77 = vmatprep.subr.bf16.mxu0 0
    %78 = vmatpush1.bf16.msra.mxu0 0
    %79 = vmatprep.subr.bf16.mxu0 0
    %80 = vmatpush1.bf16.msra.mxu0 0
    %81 = vmatprep.subr.bf16.mxu0 0
    %82 = vmatpush1.bf16.msra.mxu0 0
    %83 = vmatprep.subr.bf16.mxu0 0
    %84 = vmatpush1.bf16.msra.mxu0 0
    %85 = vmatprep.subr.bf16.mxu0 0
    %86 = vmatpush1.bf16.msra.mxu0 0
    %87 = vmatprep.subr.bf16.mxu0 0
    %88 = vmatpush1.bf16.msra.mxu0 0
    %89 = vmatprep.subr.bf16.mxu0 0
    %90 = vmatpush1.bf16.msra.mxu0 %v75
    %91 = vmatprep.subr.bf16.mxu0 0
    %92 = vmatpush1.bf16.msra.mxu0 %v66
    %93 = vmatprep.subr.bf16.mxu0 0
    %94 = vmatpush2.bf16.msra.mxu0 0
    %95 = vmatprep.subr.bf16.mxu0 0
    %96 = vmatpush2.bf16.msra.mxu0 0
    %97 = vmatprep.subr.bf16.mxu0 0
    %98 = vmatpush2.bf16.msra.mxu0 0
    %99 = vmatprep.subr.bf16.mxu0 0
    %100 = vmatpush2.bf16.msra.mxu0 0
    %101 = vmatprep.subr.bf16.mxu0 0
    %102 = vmatpush2.bf16.msra.mxu0 0
    %103 = vmatprep.subr.bf16.mxu0 0
    %104 = vmatpush2.bf16.msra.mxu0 0
    %105 = vmatprep.subr.bf16.mxu0 0
    %106 = vmatpush2.bf16.msra.mxu0 0
    %107 = vmatprep.subr.bf16.mxu0 0
    %108 = vmatpush2.bf16.msra.mxu0 0
    %109 = vmatprep.mubr.bf16.mxu0 0
    %110 = vmatmul.mubr.bf16.gmra.mxu0 %v71
    %v111 = vpop.f32.mrf.mxu0
    %v112 = vadd.f32 0.0, %v111
    %v113 = vpop.f32.mrf.mxu0
    %v114 = vpop.f32.mrf.mxu0
    %v115 = vadd.f32 0.0, %v114
    %v116 = vpop.f32.mrf.mxu0
    %117 = vdwg.mxu0
    %v118 = vld [vmem:[%s2] sm:$0x1]
    %v120 = vlaneseq
    %v121 = vshrl.u32 %v120, 7
    %v122 = vsub.s32 0, %v121
    %v123 = vrot.slane %v118, %v122
    %v125 = vmul.f32 %v112, %v123
    %v126 = vmul.f32 %v115, %v123
    %v127 = vand.u32 2147483647, %v125
    %v128 = vand.u32 2147483647, %v126
    %vm129 = vcmp.lt.f32.partialorder %v127, 1.0
    %vm130 = vcmp.lt.f32.partialorder %v128, 1.0
    %v131 = vmul.f32 %v125, 0.5
    %v132 = vmul.f32 %v126, 0.5
    %v133 = vmul.f32 %v131, %v125
    %v134 = vmul.f32 %v132, %v126
    %v135 = vsub.f32 %v127, 0.5
    %v136 = vsub.f32 %v128, 0.5
    %v137 = vsel %vm129, %v133, %v135
    %v138 = vsel %vm130, %v134, %v136
    %s139 = sld [smem:[#allocation7]]
    %v140 = vadd.f32 %v137, %v138
    %141 = vadd.xlane.f32.xlu0 %v140
    %v142 = vpop.xlane.xlu0 %141
    %v143 = vrot.slane %v142, 4
    %v144 = vadd.f32 %v142, %v143
    %v145 = vrot.slane %v144, 2
    %v146 = vadd.f32 %v144, %v145
    %v147 = vrot.slane %v146, 1
    %v148 = vadd.f32 %v146, %v147
    %s149 = vtos %v148
    %s150 = sadd.f32 %s139, %s149
    %s151 = scalar_lea.smem [#allocation7], 0
    %152 = sst [smem:[%s151]] %s150
    // Predicated region
    $region26: #{tpu_custom_call.1} parent=1 // pred_check
      _
    $region27: #{tpu_custom_call.1} parent=1 // pred_check_branch
      %154 = sbr.rel (0) target = $region29
    $region28: #{tpu_custom_call.1} parent=1 // pred_region
      %s156 = ssub.s32 16, 16
      %157 = vsyncadd [#allocation4], %s156
      %160 = dma.smem_to_hbm [#allocation7], 16, %s3, [#allocation4]
    $region29: #{tpu_custom_call.1} parent=1 // pred_fallthru
      _
    // Predicated region
    $region30: #{tpu_custom_call.1} parent=1 // pred_check
      _
    $region31: #{tpu_custom_call.1} parent=1 // pred_check_branch
      %162 = sbr.rel (0) target = $region33
    $region32: #{tpu_custom_call.1} parent=1 // pred_region
      %163 = dma.done [#allocation4], 16
    $region33: #{tpu_custom_call.1} parent=1 // pred_fallthru
      _
    %164 = sfence
    %165 = vsyncpa [#allocation3], 1
    %166 = vsyncpa [#allocation6], 1
    %167 = vsyncpa [#allocation4], 1

</llo_original>
